<compile_context>
chip_gen: v6e
topology: v6e:2x2x1
jax: 0.10.0
libtpu: 0.0.40
codegen_flags: <defaults>
</compile_context>

<pallas_src>
import numpy as np
import jax
import jax.numpy as jnp
from jax import lax
from jax.experimental import pallas as pl
from jax.experimental.pallas import tpu as pltpu

EPS = 1e-5
MAT_W = 320      # lane width of packed matrix slab (= max contraction dim)
VEC_W = 8        # lane width of packed per-row / per-channel vector slab


def _pad8(n):
    return ((n + 7) // 8) * 8


class _Slab:
    """Packs many small f32 matrices into one 2-D slab (row offsets 8-aligned)."""

    def __init__(self, width):
        self.width = width
        self.parts = []
        self.off = 0

    def add(self, m, rows=None, cols=None):
        m = np.asarray(m, np.float32)
        if m.ndim == 1:
            m = m[:, None]
        r, c = m.shape
        rp = _pad8(r)
        buf = np.zeros((rp, self.width), np.float32)
        buf[:r, :c] = m
        entry = (self.off, rows if rows is not None else r,
                 cols if cols is not None else c)
        assert entry[1] <= rp and entry[2] <= self.width
        self.parts.append(buf)
        self.off += rp
        return entry

    def finalize(self):
        return jnp.asarray(np.concatenate(self.parts, axis=0))


def _roll_matches_np_roll():
    """One-time probe: True if pltpu.roll(x, s, ax) == np.roll(x, s, ax)."""
    def k(x_ref, o_ref):
        o_ref[...] = pltpu.roll(x_ref[...], 1, 1)

    x = jnp.tile(jnp.arange(128, dtype=jnp.int32), (8, 1))
    out = pl.pallas_call(k, out_shape=jax.ShapeDtypeStruct((8, 128), jnp.int32))(x)
    return int(out[0, 0]) == 127


# ----------------------------- fused kernel -----------------------------

def _make_fused_kernel(meta, T, L):
    np_roll = meta["np_roll"]

    def ld(ref, entry):
        off, r, c = entry
        return ref[off:off + r, 0:c]

    def kernel(x_ref, mat_ref, vec_ref, o_ref):
        # time index within each packed length-T batch segment (lane = b*T + t)
        tt = lax.broadcasted_iota(jnp.int32, (1, L), 1) % T

        def tshift(a, dt):
            # out[..., l] = a[..., l + dt] inside each segment, zero padded.
            if dt == 0:
                return a
            s = ((-dt) if np_roll else dt) % L
            rolled = pltpu.roll(a, s, 1)                     # XLU lane rotate
            mask = (tt < T - dt) if dt > 0 else (tt >= -dt)  # zero-pad boundary
            return jnp.where(mask, rolled, 0.0)

        x = x_ref[0]                                         # (40, L)

        # ---- stem Conv2d(1,16,(5,5),stride=(2,1),pad=(2,2)) as ONE matmul ----
        xs = jnp.concatenate([tshift(x, dt) for dt in (-2, -1, 0, 1, 2)], axis=0)
        h = jnp.dot(ld(mat_ref, meta["stem"]["M"]), xs,
                    preferred_element_type=jnp.float32)
        h = h + ld(vec_ref, meta["stem"]["b"])               # (320, L)

        # ---- 12 BCConvBlocks (eval mode), fully unrolled ----
        for bk in meta["blocks"]:
            d = bk["t_dil"]
            rv = ld(vec_ref, bk["rv"])    # (Rout,3): ssn_scale, ssn_shift, bq
            cv = ld(vec_ref, bk["cv"])    # (C,5): w0, w1, w2, bn_scale, bn_shift

            # f2: (1x1 transition o depthwise freq conv) + SubSpectralNorm folded
            f2 = jnp.dot(ld(mat_ref, bk["Wc"]), h, preferred_element_type=jnp.float32)
            f2 = f2 * rv[:, 0:1] + rv[:, 1:2]

            # mean over frequency
            m = jnp.dot(ld(mat_ref, bk["Avg"]), f2, preferred_element_type=jnp.float32)

            # depthwise dilated time conv (rolls) + folded BatchNorm + SiLU
            z = cv[:, 1:2] * m + cv[:, 0:1] * tshift(m, -d) + cv[:, 2:3] * tshift(m, d)
            z = z * cv[:, 3:4] + cv[:, 4:5]
            z = z * pl.reciprocal(1.0 + jnp.exp(-z), approx=True)   # SiLU on EUP

            # 1x1 conv with the broadcast-over-frequency folded in (Wq = Exp @ Wpw)
            f1 = jnp.dot(ld(mat_ref, bk["Wq"]), z, preferred_element_type=jnp.float32)
            f1 = f1 + rv[:, 2:3]

            hn = f1 + f2
            if bk["residual"]:
                hn = hn + h
            h = hn

        # ---- final depthwise Conv2d(20,20,(5,5),groups=20,pad=(0,2)): F 5->1 ----
        out = None
        for kt in range(5):
            y = jnp.dot(ld(mat_ref, meta["final"]["D"][kt]), tshift(h, kt - 2),
                        preferred_element_type=jnp.float32)
            out = y if out is None else out + y
        o_ref[0] = out + ld(vec_ref, meta["final"]["b"])

    return kernel


# ----------------------------- parameter construction (glue) -----------------------------

# BCResNet (mult=1, n_mels=40): (in_c, out_c, f_stride, t_dilation, F_in, F_out)
BLOCK_CFG = [
    (16, 8, 1, 1, 20, 20), (8, 8, 1, 1, 20, 20),
    (8, 12, 2, 2, 20, 10), (12, 12, 1, 2, 10, 10),
    (12, 16, 2, 4, 10, 5), (16, 16, 1, 4, 5, 5), (16, 16, 1, 4, 5, 5), (16, 16, 1, 4, 5, 5),
    (16, 20, 1, 8, 5, 5), (20, 20, 1, 8, 5, 5), (20, 20, 1, 8, 5, 5), (20, 20, 1, 8, 5, 5),
]


def _build_block(rng, mat, vec, in_c, out_c, f_stride, t_dil, F_in, F_out):
    C = out_c
    has_transition = (in_c != out_c)
    sc = 0.1
    if has_transition:
        Wt = rng.normal(size=(C, in_c)) * sc
        bt = rng.normal(size=(C,)) * 0.05
    else:
        Wt = np.eye(C)
        bt = np.zeros(C)
    w_f2 = rng.normal(size=(C, 3)) * sc            # depthwise freq conv (f_ks=3)
    b_f2 = rng.normal(size=(C,)) * 0.05
    g_s = rng.uniform(0.5, 1.5, size=(C * 5,))     # SubSpectralNorm(C, 5) params
    be_s = rng.normal(size=(C * 5,)) * 0.05
    rm_s = rng.normal(size=(C * 5,)) * 0.05
    rv_s = rng.uniform(0.5, 1.5, size=(C * 5,))
    w_t = rng.normal(size=(C, 3)) * sc             # depthwise time conv (t_ks=3)
    b_t = rng.normal(size=(C,)) * 0.05
    g_b = rng.uniform(0.5, 1.5, size=(C,))         # BatchNorm2d(C) params
    be_b = rng.normal(size=(C,)) * 0.05
    rm_b = rng.normal(size=(C,)) * 0.05
    rv_b = rng.uniform(0.5, 1.5, size=(C,))
    Wpw = rng.normal(size=(C, C)) * sc             # 1x1 conv
    bpw = rng.normal(size=(C,)) * 0.05

    # depthwise frequency conv (f_ks=3, dilation 1, pad 1) as Toeplitz B
    B = np.zeros((C, F_out, F_in))
    for fo in range(F_out):
        for kf in range(3):
            fi = fo * f_stride + kf - 1
            if 0 <= fi < F_in:
                B[:, fo, fi] += w_f2[:, kf]
    # fold the 1x1 transition conv into the same matmul
    Wc = (B[:, :, None, :] * Wt[:, None, :, None]).reshape(C * F_out, in_c * F_in)
    bias_pre = b_f2[:, None] + bt[:, None] * B.sum(axis=2)          # (C, F_out)

    # SubSpectralNorm (eval) folded into per-(c,f) scale/shift (+ conv biases)
    sub = F_out // 5
    idx = np.arange(C)[:, None] * 5 + (np.arange(F_out)[None, :] // sub)
    ssn_scale = g_s[idx] / np.sqrt(rv_s[idx] + EPS)
    ssn_shift = be_s[idx] - rm_s[idx] * ssn_scale + ssn_scale * bias_pre

    Avg = np.zeros((C, C * F_out))
    for c in range(C):
        Avg[c, c * F_out:(c + 1) * F_out] = 1.0 / F_out

    bn_scale = g_b / np.sqrt(rv_b + EPS)
    bn_shift = be_b - rm_b * bn_scale + bn_scale * b_t

    # fold the broadcast-over-frequency (Exp) into the 1x1 conv:  Wq = Exp @ Wpw
    Wq = np.repeat(Wpw, F_out, axis=0)                              # (C*F_out, C)
    bq = np.repeat(bpw, F_out)

    rv_pack = np.stack([ssn_scale.reshape(-1), ssn_shift.reshape(-1), bq], axis=1)
    cv_pack = np.stack([w_t[:, 0], w_t[:, 1], w_t[:, 2], bn_scale, bn_shift], axis=1)

    R_in, R_out = in_c * F_in, C * F_out
    return {
        "Wc": mat.add(Wc, rows=_pad8(R_out), cols=_pad8(R_in)),
        "Avg": mat.add(Avg, rows=_pad8(C), cols=_pad8(R_out)),
        "Wq": mat.add(Wq, rows=_pad8(R_out), cols=_pad8(C)),
        "rv": vec.add(rv_pack, rows=_pad8(R_out)),
        "cv": vec.add(cv_pack, rows=_pad8(C)),
        "t_dil": t_dil,
        "residual": not has_transition,
    }


def build_model(seed=0):
    rng = np.random.default_rng(seed)
    mat = _Slab(MAT_W)
    vec = _Slab(VEC_W)
    meta = {"np_roll": _roll_matches_np_roll()}

    # stem: Conv2d(1, 16, kernel=(5,5), stride=(2,1), padding=(2,2))
    C_out, F_in, F_out = 16, 40, 20
    W = rng.normal(size=(C_out, 5, 5)) * 0.1
    b = rng.normal(size=(C_out,)) * 0.05
    M = np.zeros((C_out * F_out, 5 * F_in))
    for kt in range(5):
        for o in range(C_out):
            for fo in range(F_out):
                for kf in range(5):
                    fi = 2 * fo + kf - 2
                    if 0 <= fi < F_in:
                        M[o * F_out + fo, kt * F_in + fi] += W[o, kf, kt]
    meta["stem"] = {"M": mat.add(M), "b": vec.add(np.repeat(b, F_out))}

    # 12 blocks
    meta["blocks"] = [_build_block(rng, mat, vec, *cfg) for cfg in BLOCK_CFG]

    # final: Conv2d(20, 20, (5,5), groups=20, padding=(0,2))  -> F 5 -> 1
    Cf, Ff = 20, 5
    Wf = rng.normal(size=(Cf, 5, 5)) * 0.1
    bf = rng.normal(size=(Cf,)) * 0.05
    Cf_pad = _pad8(Cf)
    d_entries = []
    for kt in range(5):
        D = np.zeros((Cf, Cf * Ff))
        for c in range(Cf):
            for kf in range(5):
                D[c, c * Ff + kf] = Wf[c, kf, kt]
        d_entries.append(mat.add(D, rows=Cf_pad, cols=_pad8(Cf * Ff)))
    meta["final"] = {"D": d_entries, "b": vec.add(bf, rows=Cf_pad),
                     "rows": Cf_pad, "C": Cf}

    return mat.finalize(), vec.finalize(), meta


# ----------------------------- forward wrapper -----------------------------

def _choose_batch_pack(N, T, max_lanes=512):
    nb = 1
    for k in range(1, N + 1):
        if N % k == 0 and k * T <= max_lanes:
            nb = k
    return nb


def bc_resnet_forward(x_mel, model):
    """x_mel: (N, 40, T) mel spectrogram == PyTorch self.net input (N,1,40,T).
    Returns (N, T, 20), matching `net(x).squeeze(2).transpose(-1, -2)`."""
    mat, vec, meta = model
    N, F0, T = x_mel.shape
    NB = _choose_batch_pack(N, T)
    G = N // NB
    L_real = NB * T
    L = ((L_real + 127) // 128) * 128          # lane-dense, 128-aligned
    R_fin = meta["final"]["rows"]
    C_out = meta["final"]["C"]

    # pack NB batch elements along the lane (time) axis: lane = b*T + t
    xp = x_mel.reshape(G, NB, F0, T).transpose(0, 2, 1, 3).reshape(G, F0, L_real)
    if L > L_real:
        xp = jnp.pad(xp, ((0, 0), (0, 0), (0, L - L_real)))

    out = pl.pallas_call(
        _make_fused_kernel(meta, T, L),
        out_shape=jax.ShapeDtypeStruct((G, R_fin, L), jnp.float32),
        grid=(G,),
        in_specs=[
            pl.BlockSpec((1, F0, L), lambda g: (g, 0, 0)),
            pl.BlockSpec(mat.shape, lambda g: (0, 0)),   # weight slab, resident
            pl.BlockSpec(vec.shape, lambda g: (0, 0)),   # vector slab, resident
        ],
        out_specs=pl.BlockSpec((1, R_fin, L), lambda g: (g, 0, 0)),
        compiler_params=pltpu.CompilerParams(
            dimension_semantics=("parallel",),
            vmem_limit_bytes=48 * 1024 * 1024,
        ),
    )(xp, mat, vec)

    out = out[:, :C_out, :L_real]
    out = out.reshape(G, C_out, NB, T).transpose(0, 2, 3, 1).reshape(N, T, C_out)
    return out


if __name__ == "__main__":
    N, T = 2, 32
    model = build_model(seed=0)
    key = jax.random.PRNGKey(0)
    x = jax.random.normal(key, (N, 40, T), dtype=jnp.float32)   # (N, n_mels=40, T)
    out = bc_resnet_forward(x, model)
    out = jax.block_until_ready(out)
    assert out.shape == (N, T, 20), out.shape
    assert bool(jnp.all(jnp.isfinite(out)))
    print("KERNEL_OK")
</pallas_src>

<mosaic_0001>
module attributes {stable_mosaic.version = 11 : i64} {
  func.func @k(%arg0: memref<8x128xi32, #tpu.memory_space<vmem>>, %arg1: memref<8x128xi32, #tpu.memory_space<vmem>>) attributes {dimension_semantics = [], scalar_prefetch = 0 : i64, scratch_operands = 0 : i64, tpu.core_type = #tpu.core_type<tc>} {
    %c0 = arith.constant 0 : index
    %c0_0 = arith.constant 0 : index
    %0 = vector.load %arg0[%c0, %c0_0] : memref<8x128xi32, #tpu.memory_space<vmem>>, vector<8x128xi32>
    %c1_i32 = arith.constant 1 : i32
    %1 = tpu.dynamic_rotate %0 by %c1_i32 dim 1 : vector<8x128xi32>, i32 -> vector<8x128xi32>
    %c0_1 = arith.constant 0 : index
    %c0_2 = arith.constant 0 : index
    %2 = vector.load %arg1[%c0_1, %c0_2] : memref<8x128xi32, #tpu.memory_space<vmem>>, vector<8x128xi32>
    tpu.vector_store %arg1[%c0_1, %c0_2], %1 {strides = array<i32>} : memref<8x128xi32, #tpu.memory_space<vmem>>, vector<8x128xi32>,
    return
  }
}

</mosaic_0001>

<llo_original>
// kernel: tpu_custom_call.1
$region0: #{tpu_custom_call.1}
  #allocation0 [shape = 'u32[]', space=smem, size = 0x4, offset = 0x4, fixed_abs, tag = 'smem constant byte address 0x4 - core index']
  #allocation1 [shape = 'u32[144,128]{1,0:T(1,128)}', space=vmem, size = 0x12000, scoped, tag = 'internal scratch']
  %s0 = inlined_call_operand.hbm [shape: s32[8,128], index: 0, kind: input, shape index: {}]
  %s1 = inlined_call_operand.hbm [shape: s32[8,128], index: 1, kind: output, shape index: {}]
  %s2 = sld [smem:[#allocation0]]
  $region18: #{tpu_custom_call.1} parent=0
    _
  %s4 = ssub.s32 1, %s2
  %s5 = scalar_select 0, %s4, %s2
  $region1: #{tpu_custom_call.1} parent=0
    #allocation2 [shape = 'u8[4096]{0}', space=vmem, size = 0x1000, scoped, tag = 'input window, operand 0, single buffered']
    #allocation3 [shape = 's32[1]{0}', space=sflag, size = 0x4, scoped, tag = 'scoped memory for tpu_custom_call.1']
    #allocation4 [shape = 's32[1]{0}', space=sflag, size = 0x4, scoped, tag = 'scoped memory for tpu_custom_call.1']
    #allocation5 [shape = 'u8[4096]{0}', space=vmem, size = 0x1000, scoped, tag = 'output window, operand 0, single buffered']
    %6 = vsyncpa [#allocation3], 0
    %7 = vsyncpa [#allocation4], 0
    // Predicated region
    $region2: #{tpu_custom_call.1} parent=1 // pred_check
      _
    $region3: #{tpu_custom_call.1} parent=1 // pred_check_branch
      %9 = sbr.rel (0) target = $region5
    $region4: #{tpu_custom_call.1} parent=1 // pred_region
      %s11 = ssub.s32 128, 128
      %12 = vsyncadd [#allocation3], %s11
      %s14 = sshll.u32 [#allocation2], 4
      %s15 = int_to_ptr.vmem [resolvable:$true] %s14
      %17 = dma.hbm_to_vmem [thread:$0]  %s0, 128, %s15, [#allocation3]
    $region5: #{tpu_custom_call.1} parent=1 // pred_fallthru
      _
    // Predicated region
    $region6: #{tpu_custom_call.1} parent=1 // pred_check
      _
    $region7: #{tpu_custom_call.1} parent=1 // pred_check_branch
      %19 = sbr.rel (0) target = $region9
    $region8: #{tpu_custom_call.1} parent=1 // pred_region
      %20 = dma.done [#allocation3], 128
    $region9: #{tpu_custom_call.1} parent=1 // pred_fallthru
      _
    %v21 = vld [vmem:[#allocation2] sm:$0xff]
    %22 = vrot.lane.b32.xlu0 %v21, 1
    %v23 = vpop.permute.xlu0 %22
    %24 = vst [vmem:[#allocation5] sm:$0xff] %v23
    // Predicated region
    $region10: #{tpu_custom_call.1} parent=1 // pred_check
      _
    $region11: #{tpu_custom_call.1} parent=1 // pred_check_branch
      %26 = sbr.rel (0) target = $region13
    $region12: #{tpu_custom_call.1} parent=1 // pred_region
      %s28 = ssub.s32 128, 128
      %29 = vsyncadd [#allocation4], %s28
      %s31 = sshll.u32 [#allocation5], 4
      %s32 = int_to_ptr.vmem [resolvable:$true] %s31
      %34 = dma.vmem_to_hbm [thread:$0]  %s32, 128, %s1, [#allocation4]
    $region13: #{tpu_custom_call.1} parent=1 // pred_fallthru
      _
    // Predicated region
    $region14: #{tpu_custom_call.1} parent=1 // pred_check
      _
    $region15: #{tpu_custom_call.1} parent=1 // pred_check_branch
      %36 = sbr.rel (0) target = $region17
    $region16: #{tpu_custom_call.1} parent=1 // pred_region
      %37 = dma.done [#allocation4], 128
    $region17: #{tpu_custom_call.1} parent=1 // pred_fallthru
      _
    %38 = vsyncpa [#allocation3], 1
    %39 = vsyncpa [#allocation4], 1

</llo_original>
